<compile_context>
chip_gen: v7x
topology: tpu7x:2x2x1
jax: 0.10.0
libtpu: 0.0.40
codegen_flags: <defaults>
</compile_context>

<pallas_src>
import jax
import jax.numpy as jnp
from jax.experimental import pallas as pl
from jax.experimental.pallas import tpu as pltpu

_LANES = 128          # vreg lane width
_SUBLANES = 8         # f32 sublane count
_MIN_TILE_ROWS = 512  # 256 KiB f32 block; below this per-step overhead dominates
_MAX_TILE_ROWS = 4096 # 2 MiB f32 block; in+out double-buffered ~8 MiB < 16 MiB (v5e scoped VMEM)


def _affine_leaky_kernel(params_ref, x_ref, o_ref):
    # params_ref (SMEM, float32, shape (3,)): [weight, bias, negative_slope]
    w = params_ref[0]
    b = params_ref[1]
    ns = params_ref[2]
    x = x_ref[...].astype(jnp.float32)
    y = x * w + b                                 # 1x1 conv (Cin=Cout=1) == affine
    o_ref[...] = jnp.where(y > 0, y, y * ns).astype(o_ref.dtype)   # torch.where(x2>0, x2, x2*slope)


def _fused_reference(x, weight, bias, negative_slope):
    """Plain fused-XLA path (also used as correctness reference)."""
    w = weight.reshape(()).astype(jnp.float32)
    b = bias.reshape(()).astype(jnp.float32)
    ns = jnp.float32(negative_slope)
    y = x.astype(jnp.float32) * w + b
    return jnp.where(y > 0, y, y * ns).astype(x.dtype)


def conv1x1_leakyrelu(x, weight, bias, negative_slope):
    """x: (N, 1, H, W); weight: (1, 1, 1, 1); bias: (1,). Returns (N, 1, H, W)."""
    N, C, H, W = x.shape
    assert C == 1, "Conv2d in the reference module has in_channels=1"
    dtype = x.dtype
    total = N * C * H * W

    # Ragged sizes: avoid pad + slice HBM passes entirely; one fused XLA op is
    # strictly cheaper than 3x HBM traffic around a Pallas call.
    if total % _LANES != 0 or total == 0:
        return _fused_reference(x, weight, bias, negative_slope)

    # Lane-dense slab view (free reshape of the contiguous buffer).
    rows = total // _LANES
    x2d = x.reshape(rows, _LANES)

    # Block sizing:
    #  * small inputs -> one full block (block_shape == array dims is allowed
    #    even if rows % 8 != 0),
    #  * otherwise at least 2 grid steps (v7x megacore) with blocks capped at
    #    _MAX_TILE_ROWS (2 MiB) to stay inside every generation's scoped VMEM.
    if rows <= 2 * _MIN_TILE_ROWS:
        tile_rows = rows
    else:
        half = ((pl.cdiv(rows, 2) + _SUBLANES - 1) // _SUBLANES) * _SUBLANES
        tile_rows = min(_MAX_TILE_ROWS, half)
    grid = (pl.cdiv(rows, tile_rows),)

    # Packed scalars, always float32 (SMEM is 32-bit scalar memory).
    params = jnp.concatenate([
        weight.reshape(1).astype(jnp.float32),
        bias.reshape(1).astype(jnp.float32),
        jnp.full((1,), negative_slope, dtype=jnp.float32),
    ])

    out2d = pl.pallas_call(
        _affine_leaky_kernel,
        out_shape=jax.ShapeDtypeStruct((rows, _LANES), dtype),
        grid=grid,
        in_specs=[
            pl.BlockSpec(memory_space=pltpu.SMEM),              # packed scalars
            pl.BlockSpec((tile_rows, _LANES), lambda i: (i, 0)),
        ],
        out_specs=pl.BlockSpec((tile_rows, _LANES), lambda i: (i, 0)),
        compiler_params=pltpu.CompilerParams(
            dimension_semantics=("parallel",)),                 # 2-TC sharding on v7x
    )(params, x2d)

    return out2d.reshape(N, C, H, W)


if __name__ == "__main__":
    key = jax.random.PRNGKey(0)
    kx1, kx2, kx3, kx4, kw, kb = jax.random.split(key, 6)

    # Deterministic Conv2d(1, 1, 1) parameters: weight (1,1,1,1), bias (1,)
    conv_weight = jax.random.normal(kw, (1, 1, 1, 1), dtype=jnp.float32)
    conv_bias = jax.random.normal(kb, (1,), dtype=jnp.float32)

    # Main test: negative_slope=0.01 so the where/select branch is exercised
    # (the original module's value of 1.0 makes it an identity).
    x_a = jax.random.normal(kx1, (2, 1, 64, 64), dtype=jnp.float32)
    out_a = jax.block_until_ready(conv1x1_leakyrelu(x_a, conv_weight, conv_bias, 0.01))
    ref_a = _fused_reference(x_a, conv_weight, conv_bias, 0.01)
    assert jnp.allclose(out_a, ref_a, atol=1e-6), "mismatch vs reference (slope=0.01)"

    # Small input (512 elements -> 4 full 128-lane rows, single block) with the
    # original module's slope=1.0.
    x_b = jax.random.normal(kx2, (2, 1, 16, 16), dtype=jnp.float32)
    out_b = jax.block_until_ready(conv1x1_leakyrelu(x_b, conv_weight, conv_bias, 1.0))
    ref_b = _fused_reference(x_b, conv_weight, conv_bias, 1.0)
    assert jnp.allclose(out_b, ref_b, atol=1e-6), "mismatch vs reference (slope=1.0)"

    # Multi-block grid path (rows=1536 -> tile_rows=768, grid=(2,)).
    x_c = jax.random.normal(kx3, (1, 1, 384, 512), dtype=jnp.float32)
    out_c = jax.block_until_ready(conv1x1_leakyrelu(x_c, conv_weight, conv_bias, 0.2))
    ref_c = _fused_reference(x_c, conv_weight, conv_bias, 0.2)
    assert jnp.allclose(out_c, ref_c, atol=1e-6), "mismatch vs reference (multi-block)"

    # Ragged size (35 elements) -> fused-XLA fallback, no pad/slice passes.
    x_d = jax.random.normal(kx4, (1, 1, 5, 7), dtype=jnp.float32)
    out_d = jax.block_until_ready(conv1x1_leakyrelu(x_d, conv_weight, conv_bias, 0.01))
    ref_d = _fused_reference(x_d, conv_weight, conv_bias, 0.01)
    assert jnp.allclose(out_d, ref_d, atol=1e-6), "mismatch vs reference (ragged fallback)"

    print("KERNEL_OK")
</pallas_src>

<mosaic_0001>
module attributes {stable_mosaic.version = 11 : i64} {
  func.func @_affine_leaky_kernel(%arg0: i32, %arg1: memref<3xf32, #tpu.memory_space<smem>>, %arg2: memref<64x128xf32, #tpu.memory_space<vmem>>, %arg3: memref<64x128xf32, #tpu.memory_space<vmem>>) attributes {dimension_semantics = [#tpu.dimension_semantics<parallel>], iteration_bounds = array<i64: 1>, scalar_prefetch = 0 : i64, scratch_operands = 0 : i64, tpu.core_type = #tpu.core_type<tc>, window_params = [{transform_indices = @transform_0, window_bounds = array<i64: 3>}, {transform_indices = @transform_1, window_bounds = array<i64: 64, 128>}, {transform_indices = @transform_2, window_bounds = array<i64: 64, 128>}]} {
    %c0 = arith.constant 0 : index
    %0 = memref.load %arg1[%c0] : memref<3xf32, #tpu.memory_space<smem>>
    %c1 = arith.constant 1 : index
    %1 = memref.load %arg1[%c1] : memref<3xf32, #tpu.memory_space<smem>>
    %c2 = arith.constant 2 : index
    %2 = memref.load %arg1[%c2] : memref<3xf32, #tpu.memory_space<smem>>
    %c0_0 = arith.constant 0 : index
    %c0_1 = arith.constant 0 : index
    %3 = vector.load %arg2[%c0_0, %c0_1] : memref<64x128xf32, #tpu.memory_space<vmem>>, vector<64x128xf32>
    %4 = vector.broadcast %0 : f32 to vector<64x128xf32>
    %5 = arith.mulf %3, %4 : vector<64x128xf32>
    %6 = vector.broadcast %1 : f32 to vector<64x128xf32>
    %7 = arith.addf %5, %6 : vector<64x128xf32>
    %cst = arith.constant 0.000000e+00 : f32
    %8 = vector.broadcast %cst : f32 to vector<64x128xf32>
    %9 = arith.cmpf ogt, %7, %8 : vector<64x128xf32>
    %10 = vector.broadcast %2 : f32 to vector<64x128xf32>
    %11 = arith.mulf %7, %10 : vector<64x128xf32>
    %12 = arith.select %9, %7, %11 : vector<64x128xi1>, vector<64x128xf32>
    %c0_2 = arith.constant 0 : index
    %c0_3 = arith.constant 0 : index
    %13 = vector.load %arg3[%c0_2, %c0_3] : memref<64x128xf32, #tpu.memory_space<vmem>>, vector<64x128xf32>
    tpu.vector_store %arg3[%c0_2, %c0_3], %12 {strides = array<i32>} : memref<64x128xf32, #tpu.memory_space<vmem>>, vector<64x128xf32>,
    return
  }
  func.func @transform_0(%arg0: i32) -> i32 {
    %c0_i32 = arith.constant 0 : i32
    %c0_i32_0 = arith.constant 0 : i32
    return %c0_i32 : i32
  }
  func.func @transform_1(%arg0: i32) -> (i32, i32) {
    %c0_i32 = arith.constant 0 : i32
    %c0_i32_0 = arith.constant 0 : i32
    return %arg0, %c0_i32 : i32, i32
  }
  func.func @transform_2(%arg0: i32) -> (i32, i32) {
    %c0_i32 = arith.constant 0 : i32
    %c0_i32_0 = arith.constant 0 : i32
    return %arg0, %c0_i32 : i32, i32
  }
}

</mosaic_0001>

<llo_original>
// kernel: tpu_custom_call.1
$region0: #{tpu_custom_call.1}
  #allocation0 [shape = 'u32[]', space=smem, size = 0x4, offset = 0x4, fixed_abs, tag = 'smem constant byte address 0x4 - core index']
  #allocation1 [shape = 'u32[144,128]{1,0:T(1,128)}', space=vmem, size = 0x12000, scoped, tag = 'internal scratch']
  %s0 = inlined_call_operand.hbm [shape: f32[3], index: 0, kind: input, shape index: {}]
  %s1 = inlined_call_operand.hbm [shape: f32[64,128], index: 1, kind: input, shape index: {}]
  %s2 = inlined_call_operand.hbm [shape: f32[64,128], index: 2, kind: output, shape index: {}]
  %s3 = sld [smem:[#allocation0]]
  $region26: #{tpu_custom_call.1} parent=0
    _
  %s5 = ssub.s32 1, %s3
  %s6 = scalar_select 0, %s5, %s3
  $region1: #{tpu_custom_call.1} parent=0
    #allocation2 [shape = 'u8[512]{0}', space=smem, size = 0x200, scoped, tag = 'input window, operand 0, single buffered']
    #allocation3 [shape = 's32[1]{0}', space=sflag, size = 0x4, scoped, tag = 'scoped memory for tpu_custom_call.1']
    #allocation4 [shape = 's32[1]{0}', space=sflag, size = 0x4, scoped, tag = 'scoped memory for tpu_custom_call.1']
    #allocation5 [shape = 's32[1]{0}', space=sflag, size = 0x4, scoped, tag = 'scoped memory for tpu_custom_call.1']
    #allocation6 [shape = 'u8[32768]{0}', space=vmem, size = 0x8000, scoped, tag = 'input window, operand 1, single buffered']
    #allocation7 [shape = 'u8[32768]{0}', space=vmem, size = 0x8000, scoped, tag = 'output window, operand 0, single buffered']
    %7 = vsyncpa [#allocation5], 0
    %8 = vsyncpa [#allocation3], 0
    %9 = vsyncpa [#allocation4], 0
    // Predicated region
    $region2: #{tpu_custom_call.1} parent=1 // pred_check
      _
    $region3: #{tpu_custom_call.1} parent=1 // pred_check_branch
      %11 = sbr.rel (0) target = $region5
    $region4: #{tpu_custom_call.1} parent=1 // pred_region
      %s13 = ssub.s32 16, 16
      %14 = vsyncadd [#allocation5], %s13
      %17 = dma.hbm_to_smem %s0, 16, [#allocation2], [#allocation5]
    $region5: #{tpu_custom_call.1} parent=1 // pred_fallthru
      _
    // Predicated region
    $region6: #{tpu_custom_call.1} parent=1 // pred_check
      _
    $region7: #{tpu_custom_call.1} parent=1 // pred_check_branch
      %19 = sbr.rel (0) target = $region9
    $region8: #{tpu_custom_call.1} parent=1 // pred_region
      %s21 = ssub.s32 1024, 1024
      %22 = vsyncadd [#allocation3], %s21
      %s23 = sshll.u32 [#allocation6], 4
      %s24 = int_to_ptr.vmem [resolvable:$true] %s23
      %29 = dma.hbm_to_vmem [thread:$0]  %s1, 1024, %s24, [#allocation3], 128, 128, 8
    $region9: #{tpu_custom_call.1} parent=1 // pred_fallthru
      _
    // Predicated region
    $region10: #{tpu_custom_call.1} parent=1 // pred_check
      _
    $region11: #{tpu_custom_call.1} parent=1 // pred_check_branch
      %31 = sbr.rel (0) target = $region13
    $region12: #{tpu_custom_call.1} parent=1 // pred_region
      %32 = dma.done [#allocation5], 16
    $region13: #{tpu_custom_call.1} parent=1 // pred_fallthru
      _
    // Predicated region
    $region14: #{tpu_custom_call.1} parent=1 // pred_check
      _
    $region15: #{tpu_custom_call.1} parent=1 // pred_check_branch
      %34 = sbr.rel (0) target = $region17
    $region16: #{tpu_custom_call.1} parent=1 // pred_region
      %35 = dma.done [#allocation3], 1024
    $region17: #{tpu_custom_call.1} parent=1 // pred_fallthru
      _
    %36 = sfence
    %s37 = sld [smem:[#allocation2]]
    %s38 = sld [smem:[#allocation2 + $0x1]]
    %s39 = sld [smem:[#allocation2 + $0x2]]
    %v40 = vld [vmem:[#allocation6] sm:$0xff]
    %v41 = vld [vmem:[#allocation6 + $0x8] sm:$0xff]
    %v42 = vld [vmem:[#allocation6 + $0x10] sm:$0xff]
    %v43 = vld [vmem:[#allocation6 + $0x18] sm:$0xff]
    %v44 = vld [vmem:[#allocation6 + $0x20] sm:$0xff]
    %v45 = vld [vmem:[#allocation6 + $0x28] sm:$0xff]
    %v46 = vld [vmem:[#allocation6 + $0x30] sm:$0xff]
    %v47 = vld [vmem:[#allocation6 + $0x38] sm:$0xff]
    %v48 = vstv %s37
    %v49 = vmul.f32 %v40, %v48
    %v50 = vmul.f32 %v41, %v48
    %v51 = vmul.f32 %v42, %v48
    %v52 = vmul.f32 %v43, %v48
    %v53 = vmul.f32 %v44, %v48
    %v54 = vmul.f32 %v45, %v48
    %v55 = vmul.f32 %v46, %v48
    %v56 = vmul.f32 %v47, %v48
    %v57 = vstv %s38
    %v58 = vadd.f32 %v49, %v57
    %v59 = vadd.f32 %v50, %v57
    %v60 = vadd.f32 %v51, %v57
    %v61 = vadd.f32 %v52, %v57
    %v62 = vadd.f32 %v53, %v57
    %v63 = vadd.f32 %v54, %v57
    %v64 = vadd.f32 %v55, %v57
    %v65 = vadd.f32 %v56, %v57
    %vm66 = vcmp.gt.f32.partialorder %v58, 0.0
    %vm67 = vcmp.gt.f32.partialorder %v59, 0.0
    %vm68 = vcmp.gt.f32.partialorder %v60, 0.0
    %vm69 = vcmp.gt.f32.partialorder %v61, 0.0
    %vm70 = vcmp.gt.f32.partialorder %v62, 0.0
    %vm71 = vcmp.gt.f32.partialorder %v63, 0.0
    %vm72 = vcmp.gt.f32.partialorder %v64, 0.0
    %vm73 = vcmp.gt.f32.partialorder %v65, 0.0
    %v74 = vstv %s39
    %v75 = vmul.f32 %v58, %v74
    %v76 = vmul.f32 %v59, %v74
    %v77 = vmul.f32 %v60, %v74
    %v78 = vmul.f32 %v61, %v74
    %v79 = vmul.f32 %v62, %v74
    %v80 = vmul.f32 %v63, %v74
    %v81 = vmul.f32 %v64, %v74
    %v82 = vmul.f32 %v65, %v74
    %v83 = vsel %vm66, %v58, %v75
    %v84 = vsel %vm67, %v59, %v76
    %v85 = vsel %vm68, %v60, %v77
    %v86 = vsel %vm69, %v61, %v78
    %v87 = vsel %vm70, %v62, %v79
    %v88 = vsel %vm71, %v63, %v80
    %v89 = vsel %vm72, %v64, %v81
    %v90 = vsel %vm73, %v65, %v82
    %91 = vst [vmem:[#allocation7] sm:$0xff] %v83
    %92 = vst [vmem:[#allocation7 + $0x8] sm:$0xff] %v84
    %93 = vst [vmem:[#allocation7 + $0x10] sm:$0xff] %v85
    %94 = vst [vmem:[#allocation7 + $0x18] sm:$0xff] %v86
    %95 = vst [vmem:[#allocation7 + $0x20] sm:$0xff] %v87
    %96 = vst [vmem:[#allocation7 + $0x28] sm:$0xff] %v88
    %97 = vst [vmem:[#allocation7 + $0x30] sm:$0xff] %v89
    %98 = vst [vmem:[#allocation7 + $0x38] sm:$0xff] %v90
    // Predicated region
    $region18: #{tpu_custom_call.1} parent=1 // pred_check
      _
    $region19: #{tpu_custom_call.1} parent=1 // pred_check_branch
      %100 = sbr.rel (0) target = $region21
    $region20: #{tpu_custom_call.1} parent=1 // pred_region
      %s102 = ssub.s32 1024, 1024
      %103 = vsyncadd [#allocation4], %s102
      %s104 = sshll.u32 [#allocation7], 4
      %s105 = int_to_ptr.vmem [resolvable:$true] %s104
      %110 = dma.vmem_to_hbm [thread:$0]  %s105, 1024, %s2, [#allocation4], 128, 128, 8
    $region21: #{tpu_custom_call.1} parent=1 // pred_fallthru
      _
    // Predicated region
    $region22: #{tpu_custom_call.1} parent=1 // pred_check
      _
    $region23: #{tpu_custom_call.1} parent=1 // pred_check_branch
      %112 = sbr.rel (0) target = $region25
    $region24: #{tpu_custom_call.1} parent=1 // pred_region
      %113 = dma.done [#allocation4], 1024
    $region25: #{tpu_custom_call.1} parent=1 // pred_fallthru
      _
    %114 = vsyncpa [#allocation3], 1
    %115 = vsyncpa [#allocation4], 1
    %116 = vsyncpa [#allocation5], 1

</llo_original>
